<compile_context>
chip_gen: v7x
topology: tpu7x:2x2x1
jax: 0.10.0
libtpu: 0.0.40
codegen_flags: <defaults>
</compile_context>

<pallas_src>
import functools

import jax
import jax.numpy as jnp
from jax import lax
from jax.experimental import pallas as pl
from jax.experimental.pallas import tpu as pltpu

N_FEATURES = 20
N_HIDDEN = 20
N_LAYERS = 6           # 5 hidden + output
FPAD = 32              # padded hidden width (multiple of 8 sublanes)
OUT_ROWS = 8           # rows kept for the output layer (min f32 sublane tile)


def net5_kernel(x_ref, w0_ref, wh_ref, wo_ref, b_ref, o_ref):
    """x_ref : (TILE_B, N_FEATURES)      raw batch-major input block
    w0_ref  : (FPAD, N_FEATURES) bf16    fc1 weight (rows 20..31 zero)
    wh_ref  : (4, FPAD, FPAD)    bf16    fc2..fc5 weights (zero padded)
    wo_ref  : (OUT_ROWS, FPAD)   bf16    output weight (only row 0 real)
    b_ref   : (N_LAYERS, FPAD, 1) f32    all biases (zero padded)
    o_ref   : (1, TILE_B)                lane-dense output row."""
    xb = x_ref[...].astype(jnp.bfloat16)                       # (TILE_B, NF)

    # Layer 0: contract feature dims -> feature-major (FPAD, TILE_B); the implied
    # transpose of xb goes to the XLU (slack), keeping h lane-dense over the batch.
    acc = lax.dot_general(
        w0_ref[...], xb,
        dimension_numbers=(((1,), (1,)), ((), ())),
        preferred_element_type=jnp.float32)                    # (FPAD, TILE_B) f32
    h = jnp.maximum(acc + b_ref[0], 0.0).astype(jnp.bfloat16)  # bias add on idle VPU

    # Hidden layers 2..5: one MXU matmul + f32 bias/ReLU + bf16 downcast each.
    for l in range(N_LAYERS - 2):
        acc = jnp.dot(wh_ref[l], h, preferred_element_type=jnp.float32)
        h = jnp.maximum(acc + b_ref[l + 1], 0.0).astype(jnp.bfloat16)

    # Output layer: only 8 rows (row 0 real).  Double ReLU collapses to one.
    acc = jnp.dot(wo_ref[...], h, preferred_element_type=jnp.float32)   # (8, TILE_B)
    out = jnp.maximum(acc + b_ref[N_LAYERS - 1, 0:OUT_ROWS, :], 0.0)
    o_ref[...] = out[0:1, :].astype(o_ref.dtype)


def pack_params(params):
    """params: list of 6 (W, b) in PyTorch layout — W: (out, in), b: (out,).
    Returns (w0, w_hidden, w_out, biases); weights in bf16 (zero padded so padded
    rows/cols contribute exactly nothing), biases in f32."""
    assert len(params) == N_LAYERS
    w0 = jnp.zeros((FPAD, N_FEATURES), jnp.float32)
    wh = jnp.zeros((N_LAYERS - 2, FPAD, FPAD), jnp.float32)
    wo = jnp.zeros((OUT_ROWS, FPAD), jnp.float32)
    bs = jnp.zeros((N_LAYERS, FPAD, 1), jnp.float32)

    w, b = params[0]
    assert w.shape == (N_HIDDEN, N_FEATURES)
    w0 = w0.at[: w.shape[0], :].set(w.astype(jnp.float32))
    bs = bs.at[0, : b.shape[0], 0].set(b.astype(jnp.float32))

    for l in range(1, N_LAYERS - 1):
        w, b = params[l]
        assert w.shape[0] <= FPAD and w.shape[1] <= FPAD
        wh = wh.at[l - 1, : w.shape[0], : w.shape[1]].set(w.astype(jnp.float32))
        bs = bs.at[l, : b.shape[0], 0].set(b.astype(jnp.float32))

    w, b = params[-1]
    assert w.shape[0] <= OUT_ROWS and w.shape[1] <= FPAD
    wo = wo.at[: w.shape[0], : w.shape[1]].set(w.astype(jnp.float32))
    bs = bs.at[N_LAYERS - 1, : b.shape[0], 0].set(b.astype(jnp.float32))

    return (w0.astype(jnp.bfloat16), wh.astype(jnp.bfloat16),
            wo.astype(jnp.bfloat16), bs)


def _round_up(n, m):
    return ((n + m - 1) // m) * m


def _tile_plan(B, tile_b):
    """Pick (tile, grid).  Small batches: one full-extent block.  Larger batches:
    lane-aligned tiles, capped so there are >= 2 tiles (keeps both v7x TCs busy)."""
    if B <= 256:
        return B, 1
    tile_b = max(128, _round_up(tile_b, 128))
    tb = min(tile_b, max(128, _round_up(pl.cdiv(B, 2), 128)))
    return tb, pl.cdiv(B, tb)


@functools.partial(jax.jit, static_argnames=("tile_b",))
def net5_forward(x, w0, wh, wo, bs, *, tile_b=2048):
    """x: (B, N_FEATURES); packed params from pack_params. Returns (B, 1) f32."""
    B, nf = x.shape
    assert nf == N_FEATURES, nf
    tb, grid_b = _tile_plan(B, tile_b)

    out = pl.pallas_call(
        net5_kernel,
        out_shape=jax.ShapeDtypeStruct((1, B), jnp.float32),
        grid=(grid_b,),
        in_specs=[
            # Raw input, batch-tiled.  Edge tile may be partial: OOB rows only feed
            # OOB output columns, which Pallas drops on writeback.
            pl.BlockSpec((tb, N_FEATURES), lambda i: (i, 0)),
            # Constant index_maps -> params stay VMEM-resident (one DMA each).
            pl.BlockSpec((FPAD, N_FEATURES), lambda i: (0, 0)),
            pl.BlockSpec((N_LAYERS - 2, FPAD, FPAD), lambda i: (0, 0, 0)),
            pl.BlockSpec((OUT_ROWS, FPAD), lambda i: (0, 0)),
            pl.BlockSpec((N_LAYERS, FPAD, 1), lambda i: (0, 0, 0)),
        ],
        out_specs=pl.BlockSpec((1, tb), lambda i: (0, i)),
        compiler_params=pltpu.CompilerParams(
            dimension_semantics=("parallel",)),   # batch tiles across TCs on v7x
    )(x, w0, wh, wo, bs)
    return out.T                                   # (B, 1)


def init_params(key, n_features=N_FEATURES, widths=(N_HIDDEN,) * 5, n_out=1):
    """PyTorch nn.Linear default init: U(-1/sqrt(fan_in), +1/sqrt(fan_in))."""
    dims = [n_features, *widths, n_out]
    params = []
    for i in range(len(dims) - 1):
        fan_in, fan_out = dims[i], dims[i + 1]
        key, kw, kb = jax.random.split(key, 3)
        bound = 1.0 / jnp.sqrt(jnp.float32(fan_in))
        w = jax.random.uniform(kw, (fan_out, fan_in), jnp.float32, -bound, bound)
        b = jax.random.uniform(kb, (fan_out,), jnp.float32, -bound, bound)
        params.append((w, b))
    return params


def net5_reference(x, params):
    """Pure-JAX f32 reference of Net5.forward in eval mode (dropout = identity)."""
    h = x
    for w, b in params:
        h = jnp.maximum(h @ w.T + b, 0.0)
    return h


if __name__ == "__main__":
    key = jax.random.PRNGKey(0)
    k_params, k_x1, k_x2 = jax.random.split(key, 3)

    params = init_params(k_params)
    packed = pack_params(params)

    # bf16 weights/activations vs f32 reference -> loosened tolerances.
    ATOL, RTOL = 1e-1, 1e-1

    # Small batch: single full-extent block.
    x_small = jax.random.normal(k_x1, (8, N_FEATURES), jnp.float32)
    out_small = jax.block_until_ready(net5_forward(x_small, *packed))
    ref_small = net5_reference(x_small, params)
    assert out_small.shape == (8, 1), out_small.shape
    assert jnp.allclose(out_small, ref_small, atol=ATOL, rtol=RTOL), (
        out_small, ref_small)

    # Larger batch: multi-tile grid with a partial last tile (600 = 2*256 + 88).
    x_big = jax.random.normal(k_x2, (600, N_FEATURES), jnp.float32)
    out_big = jax.block_until_ready(net5_forward(x_big, *packed, tile_b=256))
    ref_big = net5_reference(x_big, params)
    assert out_big.shape == (600, 1), out_big.shape
    assert jnp.allclose(out_big, ref_big, atol=ATOL, rtol=RTOL), (
        out_big, ref_big)

    print("KERNEL_OK")
</pallas_src>

<mosaic_0001>
module attributes {stable_mosaic.version = 11 : i64} {
  func.func @net5_kernel(%arg0: i32, %arg1: memref<8x20xf32, #tpu.memory_space<vmem>>, %arg2: memref<32x20xbf16, #tpu.memory_space<vmem>>, %arg3: memref<4x32x32xbf16, #tpu.memory_space<vmem>>, %arg4: memref<8x32xbf16, #tpu.memory_space<vmem>>, %arg5: memref<6x32x1xf32, #tpu.memory_space<vmem>>, %arg6: memref<1x8xf32, #tpu.memory_space<vmem>>) attributes {dimension_semantics = [#tpu.dimension_semantics<parallel>], iteration_bounds = array<i64: 1>, scalar_prefetch = 0 : i64, scratch_operands = 0 : i64, tpu.core_type = #tpu.core_type<tc>, window_params = [{transform_indices = @transform_0, window_bounds = array<i64: 8, 20>}, {pipeline_mode = #tpu.pipeline_mode<synchronous>, transform_indices = @transform_1, window_bounds = array<i64: 32, 20>}, {pipeline_mode = #tpu.pipeline_mode<synchronous>, transform_indices = @transform_2, window_bounds = array<i64: 4, 32, 32>}, {pipeline_mode = #tpu.pipeline_mode<synchronous>, transform_indices = @transform_3, window_bounds = array<i64: 8, 32>}, {pipeline_mode = #tpu.pipeline_mode<synchronous>, transform_indices = @transform_4, window_bounds = array<i64: 6, 32, 1>}, {transform_indices = @transform_5, window_bounds = array<i64: 1, 8>}]} {
    %c0 = arith.constant 0 : index
    %c0_0 = arith.constant 0 : index
    %0 = vector.load %arg1[%c0, %c0_0] : memref<8x20xf32, #tpu.memory_space<vmem>>, vector<8x20xf32>
    %1 = arith.truncf %0 : vector<8x20xf32> to vector<8x20xbf16>
    %c0_1 = arith.constant 0 : index
    %c0_2 = arith.constant 0 : index
    %2 = vector.load %arg2[%c0_1, %c0_2] : memref<32x20xbf16, #tpu.memory_space<vmem>>, vector<32x20xbf16>
    %cst = arith.constant dense<0.000000e+00> : vector<32x8xf32>
    %3 = tpu.matmul %2, %1, %cst {dimension_numbers = #tpu.dot_dimension_numbers<[1], [1], [0], [0], [0, 0, 1, 0], [], []>} : vector<32x20xbf16>, vector<8x20xbf16>, vector<32x8xf32> -> vector<32x8xf32>
    %c0_3 = arith.constant 0 : index
    %c0_4 = arith.constant 0 : index
    %c0_5 = arith.constant 0 : index
    %4 = vector.load %arg5[%c0_3, %c0_4, %c0_5] : memref<6x32x1xf32, #tpu.memory_space<vmem>>, vector<1x32x1xf32>
    %5 = vector.shape_cast %4 : vector<1x32x1xf32> to vector<32x1xf32>
    %6 = vector.broadcast %5 : vector<32x1xf32> to vector<32x8xf32>
    %7 = arith.addf %3, %6 : vector<32x8xf32>
    %cst_6 = arith.constant 0.000000e+00 : f32
    %8 = vector.broadcast %cst_6 : f32 to vector<32x8xf32>
    %9 = arith.maximumf %7, %8 : vector<32x8xf32>
    %10 = arith.truncf %9 : vector<32x8xf32> to vector<32x8xbf16>
    %c0_7 = arith.constant 0 : index
    %c0_8 = arith.constant 0 : index
    %c0_9 = arith.constant 0 : index
    %11 = vector.load %arg3[%c0_7, %c0_8, %c0_9] : memref<4x32x32xbf16, #tpu.memory_space<vmem>>, vector<1x32x32xbf16>
    %12 = vector.shape_cast %11 : vector<1x32x32xbf16> to vector<32x32xbf16>
    %cst_10 = arith.constant dense<0.000000e+00> : vector<32x8xf32>
    %13 = tpu.matmul %12, %10, %cst_10 {dimension_numbers = #tpu.dot_dimension_numbers<[1], [0], [0], [1], [0, 0, 1, 1], [], []>} : vector<32x32xbf16>, vector<32x8xbf16>, vector<32x8xf32> -> vector<32x8xf32>
    %c1 = arith.constant 1 : index
    %c0_11 = arith.constant 0 : index
    %c0_12 = arith.constant 0 : index
    %14 = vector.load %arg5[%c1, %c0_11, %c0_12] : memref<6x32x1xf32, #tpu.memory_space<vmem>>, vector<1x32x1xf32>
    %15 = vector.shape_cast %14 : vector<1x32x1xf32> to vector<32x1xf32>
    %16 = vector.broadcast %15 : vector<32x1xf32> to vector<32x8xf32>
    %17 = arith.addf %13, %16 : vector<32x8xf32>
    %cst_13 = arith.constant 0.000000e+00 : f32
    %18 = vector.broadcast %cst_13 : f32 to vector<32x8xf32>
    %19 = arith.maximumf %17, %18 : vector<32x8xf32>
    %20 = arith.truncf %19 : vector<32x8xf32> to vector<32x8xbf16>
    %c1_14 = arith.constant 1 : index
    %c0_15 = arith.constant 0 : index
    %c0_16 = arith.constant 0 : index
    %21 = vector.load %arg3[%c1_14, %c0_15, %c0_16] : memref<4x32x32xbf16, #tpu.memory_space<vmem>>, vector<1x32x32xbf16>
    %22 = vector.shape_cast %21 : vector<1x32x32xbf16> to vector<32x32xbf16>
    %cst_17 = arith.constant dense<0.000000e+00> : vector<32x8xf32>
    %23 = tpu.matmul %22, %20, %cst_17 {dimension_numbers = #tpu.dot_dimension_numbers<[1], [0], [0], [1], [0, 0, 1, 1], [], []>} : vector<32x32xbf16>, vector<32x8xbf16>, vector<32x8xf32> -> vector<32x8xf32>
    %c2 = arith.constant 2 : index
    %c0_18 = arith.constant 0 : index
    %c0_19 = arith.constant 0 : index
    %24 = vector.load %arg5[%c2, %c0_18, %c0_19] : memref<6x32x1xf32, #tpu.memory_space<vmem>>, vector<1x32x1xf32>
    %25 = vector.shape_cast %24 : vector<1x32x1xf32> to vector<32x1xf32>
    %26 = vector.broadcast %25 : vector<32x1xf32> to vector<32x8xf32>
    %27 = arith.addf %23, %26 : vector<32x8xf32>
    %cst_20 = arith.constant 0.000000e+00 : f32
    %28 = vector.broadcast %cst_20 : f32 to vector<32x8xf32>
    %29 = arith.maximumf %27, %28 : vector<32x8xf32>
    %30 = arith.truncf %29 : vector<32x8xf32> to vector<32x8xbf16>
    %c2_21 = arith.constant 2 : index
    %c0_22 = arith.constant 0 : index
    %c0_23 = arith.constant 0 : index
    %31 = vector.load %arg3[%c2_21, %c0_22, %c0_23] : memref<4x32x32xbf16, #tpu.memory_space<vmem>>, vector<1x32x32xbf16>
    %32 = vector.shape_cast %31 : vector<1x32x32xbf16> to vector<32x32xbf16>
    %cst_24 = arith.constant dense<0.000000e+00> : vector<32x8xf32>
    %33 = tpu.matmul %32, %30, %cst_24 {dimension_numbers = #tpu.dot_dimension_numbers<[1], [0], [0], [1], [0, 0, 1, 1], [], []>} : vector<32x32xbf16>, vector<32x8xbf16>, vector<32x8xf32> -> vector<32x8xf32>
    %c3 = arith.constant 3 : index
    %c0_25 = arith.constant 0 : index
    %c0_26 = arith.constant 0 : index
    %34 = vector.load %arg5[%c3, %c0_25, %c0_26] : memref<6x32x1xf32, #tpu.memory_space<vmem>>, vector<1x32x1xf32>
    %35 = vector.shape_cast %34 : vector<1x32x1xf32> to vector<32x1xf32>
    %36 = vector.broadcast %35 : vector<32x1xf32> to vector<32x8xf32>
    %37 = arith.addf %33, %36 : vector<32x8xf32>
    %cst_27 = arith.constant 0.000000e+00 : f32
    %38 = vector.broadcast %cst_27 : f32 to vector<32x8xf32>
    %39 = arith.maximumf %37, %38 : vector<32x8xf32>
    %40 = arith.truncf %39 : vector<32x8xf32> to vector<32x8xbf16>
    %c3_28 = arith.constant 3 : index
    %c0_29 = arith.constant 0 : index
    %c0_30 = arith.constant 0 : index
    %41 = vector.load %arg3[%c3_28, %c0_29, %c0_30] : memref<4x32x32xbf16, #tpu.memory_space<vmem>>, vector<1x32x32xbf16>
    %42 = vector.shape_cast %41 : vector<1x32x32xbf16> to vector<32x32xbf16>
    %cst_31 = arith.constant dense<0.000000e+00> : vector<32x8xf32>
    %43 = tpu.matmul %42, %40, %cst_31 {dimension_numbers = #tpu.dot_dimension_numbers<[1], [0], [0], [1], [0, 0, 1, 1], [], []>} : vector<32x32xbf16>, vector<32x8xbf16>, vector<32x8xf32> -> vector<32x8xf32>
    %c4 = arith.constant 4 : index
    %c0_32 = arith.constant 0 : index
    %c0_33 = arith.constant 0 : index
    %44 = vector.load %arg5[%c4, %c0_32, %c0_33] : memref<6x32x1xf32, #tpu.memory_space<vmem>>, vector<1x32x1xf32>
    %45 = vector.shape_cast %44 : vector<1x32x1xf32> to vector<32x1xf32>
    %46 = vector.broadcast %45 : vector<32x1xf32> to vector<32x8xf32>
    %47 = arith.addf %43, %46 : vector<32x8xf32>
    %cst_34 = arith.constant 0.000000e+00 : f32
    %48 = vector.broadcast %cst_34 : f32 to vector<32x8xf32>
    %49 = arith.maximumf %47, %48 : vector<32x8xf32>
    %50 = arith.truncf %49 : vector<32x8xf32> to vector<32x8xbf16>
    %c0_35 = arith.constant 0 : index
    %c0_36 = arith.constant 0 : index
    %51 = vector.load %arg4[%c0_35, %c0_36] : memref<8x32xbf16, #tpu.memory_space<vmem>>, vector<8x32xbf16>
    %cst_37 = arith.constant dense<0.000000e+00> : vector<8x8xf32>
    %52 = tpu.matmul %51, %50, %cst_37 {dimension_numbers = #tpu.dot_dimension_numbers<[1], [0], [0], [1], [0, 0, 1, 1], [], []>} : vector<8x32xbf16>, vector<32x8xbf16>, vector<8x8xf32> -> vector<8x8xf32>
    %c5 = arith.constant 5 : index
    %c0_38 = arith.constant 0 : index
    %c0_39 = arith.constant 0 : index
    %53 = vector.load %arg5[%c5, %c0_38, %c0_39] : memref<6x32x1xf32, #tpu.memory_space<vmem>>, vector<1x8x1xf32>
    %54 = vector.shape_cast %53 : vector<1x8x1xf32> to vector<8x1xf32>
    %55 = vector.broadcast %54 : vector<8x1xf32> to vector<8x8xf32>
    %56 = arith.addf %52, %55 : vector<8x8xf32>
    %cst_40 = arith.constant 0.000000e+00 : f32
    %57 = vector.broadcast %cst_40 : f32 to vector<8x8xf32>
    %58 = arith.maximumf %56, %57 : vector<8x8xf32>
    %59 = vector.extract_strided_slice %58 {offsets = [0, 0], sizes = [1, 8], strides = [1, 1]} : vector<8x8xf32> to vector<1x8xf32>
    %c0_41 = arith.constant 0 : index
    %c0_42 = arith.constant 0 : index
    %60 = vector.load %arg6[%c0_41, %c0_42] : memref<1x8xf32, #tpu.memory_space<vmem>>, vector<1x8xf32>
    tpu.vector_store %arg6[%c0_41, %c0_42], %59 {strides = array<i32>} : memref<1x8xf32, #tpu.memory_space<vmem>>, vector<1x8xf32>,
    return
  }
  func.func @transform_0(%arg0: i32) -> (i32, i32) {
    %c0_i32 = arith.constant 0 : i32
    %c0_i32_0 = arith.constant 0 : i32
    return %arg0, %c0_i32 : i32, i32
  }
  func.func @transform_1(%arg0: i32) -> (i32, i32) {
    %c0_i32 = arith.constant 0 : i32
    %c0_i32_0 = arith.constant 0 : i32
    %c0_i32_1 = arith.constant 0 : i32
    return %c0_i32, %c0_i32_0 : i32, i32
  }
  func.func @transform_2(%arg0: i32) -> (i32, i32, i32) {
    %c0_i32 = arith.constant 0 : i32
    %c0_i32_0 = arith.constant 0 : i32
    %c0_i32_1 = arith.constant 0 : i32
    %c0_i32_2 = arith.constant 0 : i32
    return %c0_i32, %c0_i32_0, %c0_i32_1 : i32, i32, i32
  }
  func.func @transform_3(%arg0: i32) -> (i32, i32) {
    %c0_i32 = arith.constant 0 : i32
    %c0_i32_0 = arith.constant 0 : i32
    %c0_i32_1 = arith.constant 0 : i32
    return %c0_i32, %c0_i32_0 : i32, i32
  }
  func.func @transform_4(%arg0: i32) -> (i32, i32, i32) {
    %c0_i32 = arith.constant 0 : i32
    %c0_i32_0 = arith.constant 0 : i32
    %c0_i32_1 = arith.constant 0 : i32
    %c0_i32_2 = arith.constant 0 : i32
    return %c0_i32, %c0_i32_0, %c0_i32_1 : i32, i32, i32
  }
  func.func @transform_5(%arg0: i32) -> (i32, i32) {
    %c0_i32 = arith.constant 0 : i32
    %c0_i32_0 = arith.constant 0 : i32
    return %c0_i32, %arg0 : i32, i32
  }
}

</mosaic_0001>

<llo_original>
// kernel: net5_forward.1
$region0: #{net5_forward.1}
  #allocation0 [shape = 'u32[]', space=smem, size = 0x4, offset = 0x4, fixed_abs, tag = 'smem constant byte address 0x4 - core index']
  #allocation1 [shape = 'u32[144,128]{1,0:T(1,128)}', space=vmem, size = 0x12000, scoped, tag = 'internal scratch']
  %s0 = inlined_call_operand.vmem [shape: f32[8,20], index: 0, kind: input, shape index: {}]
  %s1 = inlined_call_operand.vmem [shape: bf16[32,20], index: 1, kind: input, shape index: {}]
  %s2 = inlined_call_operand.vmem [shape: bf16[4,32,32], index: 2, kind: input, shape index: {}]
  %s3 = inlined_call_operand.vmem [shape: bf16[8,32], index: 3, kind: input, shape index: {}]
  %s4 = inlined_call_operand.vmem [shape: f32[6,32,1], index: 4, kind: input, shape index: {}]
  %s5 = inlined_call_operand.hbm [shape: f32[1,8], index: 5, kind: output, shape index: {}]
  %s6 = sld [smem:[#allocation0]]
  $region30: #{net5_forward.1} parent=0
    _
  %s8 = ssub.s32 1, %s6
  %s9 = scalar_select 0, %s8, %s6
  $region1: #{net5_forward.1} parent=0
    #allocation2 [shape = 'u8[512]{0}', space=vmem, size = 0x400, scoped, tag = 'output window, operand 0, single buffered']
    #allocation3 [shape = 's32[1]{0}', space=sflag, size = 0x4, scoped, tag = 'scoped memory for net5_forward.1']
    %10 = vsyncpa [#allocation3], 0
    // Predicated region
    $region2: #{net5_forward.1} parent=1 // pred_check
      _
    $region3: #{net5_forward.1} parent=1 // pred_check_branch
      %12 = sbr.rel (0) target = $region5
    $region4: #{net5_forward.1} parent=1 // pred_region
      _
    $region5: #{net5_forward.1} parent=1 // pred_fallthru
      _
    // Predicated region
    $region6: #{net5_forward.1} parent=1 // pred_check
      _
    $region7: #{net5_forward.1} parent=1 // pred_check_branch
      %14 = sbr.rel (0) target = $region9
    $region8: #{net5_forward.1} parent=1 // pred_region
      _
    $region9: #{net5_forward.1} parent=1 // pred_fallthru
      _
    // Predicated region
    $region10: #{net5_forward.1} parent=1 // pred_check
      _
    $region11: #{net5_forward.1} parent=1 // pred_check_branch
      %16 = sbr.rel (0) target = $region13
    $region12: #{net5_forward.1} parent=1 // pred_region
      _
    $region13: #{net5_forward.1} parent=1 // pred_fallthru
      _
    // Predicated region
    $region14: #{net5_forward.1} parent=1 // pred_check
      _
    $region15: #{net5_forward.1} parent=1 // pred_check_branch
      %18 = sbr.rel (0) target = $region17
    $region16: #{net5_forward.1} parent=1 // pred_region
      _
    $region17: #{net5_forward.1} parent=1 // pred_fallthru
      _
    // Predicated region
    $region18: #{net5_forward.1} parent=1 // pred_check
      _
    $region19: #{net5_forward.1} parent=1 // pred_check_branch
      %20 = sbr.rel (0) target = $region21
    $region20: #{net5_forward.1} parent=1 // pred_region
      _
    $region21: #{net5_forward.1} parent=1 // pred_fallthru
      _
    %v22 = vld [vmem:[%s0] sm:$0xff]
    %v23 = vpack.c.bf16 %v22, %v22
    %v24 = vld [vmem:[%s1] sm:$0xf]
    %v25 = vld [vmem:[%s1 + $0x4] sm:$0xf]
    %v26 = vld [vmem:[%s1 + $0x8] sm:$0xf]
    %v27 = vld [vmem:[%s1 + $0xc] sm:$0xf]
    %v28 = vld [vmem:[%s4] sm:$0xff]
    %v29 = vld [vmem:[%s4 + $0x8] sm:$0xff]
    %v30 = vld [vmem:[%s4 + $0x10] sm:$0xff]
    %v31 = vld [vmem:[%s4 + $0x18] sm:$0xff]
    %33 = vset.pattern.permute.xlu0 0
    %34 = vperm.xlu0 %33, %v28
    %v35 = vpop.permute.xlu0 %34
    %38 = vset.pattern.permute.xlu0 0
    %39 = vperm.xlu0 %38, %v29
    %v40 = vpop.permute.xlu0 %39
    %43 = vset.pattern.permute.xlu0 0
    %44 = vperm.xlu0 %43, %v30
    %v45 = vpop.permute.xlu0 %44
    %48 = vset.pattern.permute.xlu0 0
    %49 = vperm.xlu0 %48, %v31
    %v50 = vpop.permute.xlu0 %49
    %v56 = vunpack.c.l.b16 %v24
    %v57 = vunpack.c.l.b16 %v25
    %v58 = vunpack.c.l.b16 %v26
    %v59 = vunpack.c.l.b16 %v27
    %v60 = vpack.c.b16 %v57, %v56
    %v61 = vpack.c.b16 %v59, %v58
    %vm62 = vcmask 162816
    %v64 = vsel %vm62, %v60, 0
    %v67 = vsel %vm62, %v61, 0
    %v70 = vsel %vm62, %v23, 0
    %72 = vmatprep.subr.bf16.mxu0 0
    %73 = vmatpush1.bf16.xpose.msra.mxu0 %v70
    %74 = vmatprep.subr.bf16.mxu0 0
    %75 = vmatpush1.bf16.xpose.msra.mxu0 0
    %76 = vmatprep.subr.bf16.mxu0 0
    %77 = vmatpush1.bf16.xpose.msra.mxu0 0
    %78 = vmatprep.subr.bf16.mxu0 0
    %79 = vmatpush1.bf16.xpose.msra.mxu0 0
    %80 = vmatprep.subr.bf16.mxu0 0
    %81 = vmatpush1.bf16.xpose.msra.mxu0 0
    %82 = vmatprep.subr.bf16.mxu0 0
    %83 = vmatpush1.bf16.xpose.msra.mxu0 0
    %84 = vmatprep.subr.bf16.mxu0 0
    %85 = vmatpush1.bf16.xpose.msra.mxu0 0
    %86 = vmatprep.subr.bf16.mxu0 0
    %87 = vmatpush1.bf16.xpose.msra.mxu0 0
    %88 = vmatprep.subr.bf16.mxu0 0
    %89 = vmatpush1.bf16.xpose.msra.mxu0 0
    %90 = vmatprep.subr.bf16.mxu0 0
    %91 = vmatpush1.bf16.xpose.msra.mxu0 0
    %92 = vmatprep.subr.bf16.mxu0 0
    %93 = vmatpush1.bf16.xpose.msra.mxu0 0
    %94 = vmatprep.subr.bf16.mxu0 0
    %95 = vmatpush1.bf16.xpose.msra.mxu0 0
    %96 = vmatprep.subr.bf16.mxu0 0
    %97 = vmatpush1.bf16.xpose.msra.mxu0 0
    %98 = vmatprep.subr.bf16.mxu0 0
    %99 = vmatpush1.bf16.xpose.msra.mxu0 0
    %100 = vmatprep.subr.bf16.mxu0 0
    %101 = vmatpush1.bf16.xpose.msra.mxu0 0
    %102 = vmatprep.subr.bf16.mxu0 0
    %103 = vmatpush1.bf16.xpose.msra.mxu0 0
    %104 = vmatprep.mubr.bf16.mxu0 0
    %105 = vmatmul.mubr.bf16.gmra.mrb[0].mxu0 %v64
    %v106 = vpop.f32.mrb[0].mxu0
    %v107 = vadd.f32 %v35, %v106
    %v108 = vpop.f32.mrb[0].mxu0
    %v109 = vpop.f32.mrb[0].mxu0
    %v110 = vadd.f32 %v40, %v109
    %v111 = vpop.f32.mrb[0].mxu0
    %112 = vmatprep.mubr.bf16.mxu0 0
    %113 = vmatmul.mubr.bf16.gmra.mrb[0].mxu0 %v67
    %v114 = vpop.f32.mrb[0].mxu0
    %v115 = vadd.f32 %v45, %v114
    %v116 = vpop.f32.mrb[0].mxu0
    %v117 = vpop.f32.mrb[0].mxu0
    %v118 = vadd.f32 %v50, %v117
    %v119 = vpop.f32.mrb[0].mxu0
    %120 = vdwg.mxu0
    %v121 = vmax.f32 %v107, 0.0
    %v122 = vmax.f32 %v110, 0.0
    %v123 = vmax.f32 %v115, 0.0
    %v124 = vmax.f32 %v118, 0.0
    %v125 = vpack.c.bf16 %v122, %v121
    %v126 = vpack.c.bf16 %v124, %v123
    %v127 = vld [vmem:[%s2] sm:$0xf]
    %v128 = vld [vmem:[%s2 + $0x4] sm:$0xf]
    %v129 = vld [vmem:[%s2 + $0x8] sm:$0xf]
    %v130 = vld [vmem:[%s2 + $0xc] sm:$0xf]
    %s131 = scalar_lea.vmem %s4, 32
    %v132 = vld [vmem:[%s131] sm:$0xff]
    %v133 = vld [vmem:[%s131 + $0x8] sm:$0xff]
    %v134 = vld [vmem:[%s131 + $0x10] sm:$0xff]
    %v135 = vld [vmem:[%s131 + $0x18] sm:$0xff]
    %137 = vset.pattern.permute.xlu0 0
    %138 = vperm.xlu0 %137, %v132
    %v139 = vpop.permute.xlu0 %138
    %142 = vset.pattern.permute.xlu0 0
    %143 = vperm.xlu0 %142, %v133
    %v144 = vpop.permute.xlu0 %143
    %147 = vset.pattern.permute.xlu0 0
    %148 = vperm.xlu0 %147, %v134
    %v149 = vpop.permute.xlu0 %148
    %152 = vset.pattern.permute.xlu0 0
    %153 = vperm.xlu0 %152, %v135
    %v154 = vpop.permute.xlu0 %153
    %v160 = vunpack.c.l.b16 %v127
    %v161 = vunpack.c.l.b16 %v128
    %v162 = vunpack.c.l.b16 %v129
    %v163 = vunpack.c.l.b16 %v130
    %v164 = vpack.c.b16 %v161, %v160
    %v165 = vpack.c.b16 %v163, %v162
    %vm166 = vcmask 261120
    %v168 = vsel %vm166, %v164, 0
    %v171 = vsel %vm166, %v165, 0
    %173 = vmatprep.subr.bf16.mxu0 0
    %174 = vmatpush1.bf16.msra.mxu0 %v125
    %175 = vmatprep.subr.bf16.mxu0 0
    %176 = vmatpush1.bf16.msra.mxu0 %v126
    %177 = vmatprep.subr.bf16.mxu0 0
    %178 = vmatpush1.bf16.msra.mxu0 0
    %179 = vmatprep.subr.bf16.mxu0 0
    %180 = vmatpush1.bf16.msra.mxu0 0
    %181 = vmatprep.subr.bf16.mxu0 0
    %182 = vmatpush1.bf16.msra.mxu0 0
    %183 = vmatprep.subr.bf16.mxu0 0
    %184 = vmatpush1.bf16.msra.mxu0 0
    %185 = vmatprep.subr.bf16.mxu0 0
    %186 = vmatpush1.bf16.msra.mxu0 0
    %187 = vmatprep.subr.bf16.mxu0 0
    %188 = vmatpush1.bf16.msra.mxu0 0
    %189 = vmatprep.subr.bf16.mxu0 0
    %190 = vmatpush1.bf16.msra.mxu0 0
    %191 = vmatprep.subr.bf16.mxu0 0
    %192 = vmatpush1.bf16.msra.mxu0 0
    %193 = vmatprep.subr.bf16.mxu0 0
    %194 = vmatpush1.bf16.msra.mxu0 0
    %195 = vmatprep.subr.bf16.mxu0 0
    %196 = vmatpush1.bf16.msra.mxu0 0
    %197 = vmatprep.subr.bf16.mxu0 0
    %198 = vmatpush1.bf16.msra.mxu0 0
    %199 = vmatprep.subr.bf16.mxu0 0
    %200 = vmatpush1.bf16.msra.mxu0 0
    %201 = vmatprep.subr.bf16.mxu0 0
    %202 = vmatpush1.bf16.msra.mxu0 0
    %203 = vmatprep.subr.bf16.mxu0 0
    %204 = vmatpush1.bf16.msra.mxu0 0
    %205 = vmatprep.mubr.bf16.mxu0 0
    %206 = vmatmul.mubr.bf16.gmra.mrb[0].mxu0 %v168
    %v207 = vpop.f32.mrb[0].mxu0
    %v208 = vadd.f32 %v139, %v207
    %v209 = vpop.f32.mrb[0].mxu0
    %v210 = vpop.f32.mrb[0].mxu0
    %v211 = vadd.f32 %v144, %v210
    %v212 = vpop.f32.mrb[0].mxu0
    %213 = vmatprep.mubr.bf16.mxu0 0
    %214 = vmatmul.mubr.bf16.gmra.mrb[0].mxu0 %v171
    %v215 = vpop.f32.mrb[0].mxu0
    %v216 = vadd.f32 %v149, %v215
    %v217 = vpop.f32.mrb[0].mxu0
    %v218 = vpop.f32.mrb[0].mxu0
    %v219 = vadd.f32 %v154, %v218
    %v220 = vpop.f32.mrb[0].mxu0
    %221 = vdwg.mxu0
    %v222 = vmax.f32 %v208, 0.0
    %v223 = vmax.f32 %v211, 0.0
    %v224 = vmax.f32 %v216, 0.0
    %v225 = vmax.f32 %v219, 0.0
    %v226 = vpack.c.bf16 %v223, %v222
    %v227 = vpack.c.bf16 %v225, %v224
    %s228 = scalar_lea.vmem %s2, 16
    %v229 = vld [vmem:[%s228] sm:$0xf]
    %v230 = vld [vmem:[%s228 + $0x4] sm:$0xf]
    %v231 = vld [vmem:[%s228 + $0x8] sm:$0xf]
    %v232 = vld [vmem:[%s228 + $0xc] sm:$0xf]
    %s233 = scalar_lea.vmem %s4, 64
    %v234 = vld [vmem:[%s233] sm:$0xff]
    %v235 = vld [vmem:[%s233 + $0x8] sm:$0xff]
    %v236 = vld [vmem:[%s233 + $0x10] sm:$0xff]
    %v237 = vld [vmem:[%s233 + $0x18] sm:$0xff]
    %239 = vset.pattern.permute.xlu0 0
    %240 = vperm.xlu0 %239, %v234
    %v241 = vpop.permute.xlu0 %240
    %244 = vset.pattern.permute.xlu0 0
    %245 = vperm.xlu0 %244, %v235
    %v246 = vpop.permute.xlu0 %245
    %249 = vset.pattern.permute.xlu0 0
    %250 = vperm.xlu0 %249, %v236
    %v251 = vpop.permute.xlu0 %250
    %254 = vset.pattern.permute.xlu0 0
    %255 = vperm.xlu0 %254, %v237
    %v256 = vpop.permute.xlu0 %255
    %v262 = vunpack.c.l.b16 %v229
    %v263 = vunpack.c.l.b16 %v230
    %v264 = vunpack.c.l.b16 %v231
    %v265 = vunpack.c.l.b16 %v232
    %v266 = vpack.c.b16 %v263, %v262
    %v267 = vpack.c.b16 %v265, %v264
    %v269 = vsel %vm166, %v266, 0
    %v272 = vsel %vm166, %v267, 0
    %274 = vmatprep.subr.bf16.mxu0 0
    %275 = vmatpush1.bf16.msra.mxu0 %v226
    %276 = vmatprep.subr.bf16.mxu0 0
    %277 = vmatpush1.bf16.msra.mxu0 %v227
    %278 = vmatprep.subr.bf16.mxu0 0
    %279 = vmatpush1.bf16.msra.mxu0 0
    %280 = vmatprep.subr.bf16.mxu0 0
    %281 = vmatpush1.bf16.msra.mxu0 0
    %282 = vmatprep.subr.bf16.mxu0 0
    %283 = vmatpush1.bf16.msra.mxu0 0
    %284 = vmatprep.subr.bf16.mxu0 0
    %285 = vmatpush1.bf16.msra.mxu0 0
    %286 = vmatprep.subr.bf16.mxu0 0
    %287 = vmatpush1.bf16.msra.mxu0 0
    %288 = vmatprep.subr.bf16.mxu0 0
    %289 = vmatpush1.bf16.msra.mxu0 0
    %290 = vmatprep.subr.bf16.mxu0 0
    %291 = vmatpush1.bf16.msra.mxu0 0
    %292 = vmatprep.subr.bf16.mxu0 0
    %293 = vmatpush1.bf16.msra.mxu0 0
    %294 = vmatprep.subr.bf16.mxu0 0
    %295 = vmatpush1.bf16.msra.mxu0 0
    %296 = vmatprep.subr.bf16.mxu0 0
    %297 = vmatpush1.bf16.msra.mxu0 0
    %298 = vmatprep.subr.bf16.mxu0 0
    %299 = vmatpush1.bf16.msra.mxu0 0
    %300 = vmatprep.subr.bf16.mxu0 0
    %301 = vmatpush1.bf16.msra.mxu0 0
    %302 = vmatprep.subr.bf16.mxu0 0
    %303 = vmatpush1.bf16.msra.mxu0 0
    %304 = vmatprep.subr.bf16.mxu0 0
    %305 = vmatpush1.bf16.msra.mxu0 0
    %306 = vmatprep.mubr.bf16.mxu0 0
    %307 = vmatmul.mubr.bf16.gmra.mrb[0].mxu0 %v269
    %v308 = vpop.f32.mrb[0].mxu0
    %v309 = vadd.f32 %v241, %v308
    %v310 = vpop.f32.mrb[0].mxu0
    %v311 = vpop.f32.mrb[0].mxu0
    %v312 = vadd.f32 %v246, %v311
    %v313 = vpop.f32.mrb[0].mxu0
    %314 = vmatprep.mubr.bf16.mxu0 0
    %315 = vmatmul.mubr.bf16.gmra.mrb[0].mxu0 %v272
    %v316 = vpop.f32.mrb[0].mxu0
    %v317 = vadd.f32 %v251, %v316
    %v318 = vpop.f32.mrb[0].mxu0
    %v319 = vpop.f32.mrb[0].mxu0
    %v320 = vadd.f32 %v256, %v319
    %v321 = vpop.f32.mrb[0].mxu0
    %322 = vdwg.mxu0
    %v323 = vmax.f32 %v309, 0.0
    %v324 = vmax.f32 %v312, 0.0
    %v325 = vmax.f32 %v317, 0.0
    %v326 = vmax.f32 %v320, 0.0
    %v327 = vpack.c.bf16 %v324, %v323
    %v328 = vpack.c.bf16 %v326, %v325
    %s329 = scalar_lea.vmem %s2, 32
    %v330 = vld [vmem:[%s329] sm:$0xf]
    %v331 = vld [vmem:[%s329 + $0x4] sm:$0xf]
    %v332 = vld [vmem:[%s329 + $0x8] sm:$0xf]
    %v333 = vld [vmem:[%s329 + $0xc] sm:$0xf]
    %s334 = scalar_lea.vmem %s4, 96
    %v335 = vld [vmem:[%s334] sm:$0xff]
    %v336 = vld [vmem:[%s334 + $0x8] sm:$0xff]
    %v337 = vld [vmem:[%s334 + $0x10] sm:$0xff]
    %v338 = vld [vmem:[%s334 + $0x18] sm:$0xff]
    %340 = vset.pattern.permute.xlu0 0
    %341 = vperm.xlu0 %340, %v335
    %v342 = vpop.permute.xlu0 %341
    %345 = vset.pattern.permute.xlu0 0
    %346 = vperm.xlu0 %345, %v336
    %v347 = vpop.permute.xlu0 %346
    %350 = vset.pattern.permute.xlu0 0
    %351 = vperm.xlu0 %350, %v337
    %v352 = vpop.permute.xlu0 %351
    %355 = vset.pattern.permute.xlu0 0
    %356 = vperm.xlu0 %355, %v338
    %v357 = vpop.permute.xlu0 %356
    %v363 = vunpack.c.l.b16 %v330
    %v364 = vunpack.c.l.b16 %v331
    %v365 = vunpack.c.l.b16 %v332
    %v366 = vunpack.c.l.b16 %v333
    %v367 = vpack.c.b16 %v364, %v363
    %v368 = vpack.c.b16 %v366, %v365
    %v370 = vsel %vm166, %v367, 0
    %v373 = vsel %vm166, %v368, 0
    %375 = vmatprep.subr.bf16.mxu0 0
    %376 = vmatpush1.bf16.msra.mxu0 %v327
    %377 = vmatprep.subr.bf16.mxu0 0
    %378 = vmatpush1.bf16.msra.mxu0 %v328
    %379 = vmatprep.subr.bf16.mxu0 0
    %380 = vmatpush1.bf16.msra.mxu0 0
    %381 = vmatprep.subr.bf16.mxu0 0
    %382 = vmatpush1.bf16.msra.mxu0 0
    %383 = vmatprep.subr.bf16.mxu0 0
    %384 = vmatpush1.bf16.msra.mxu0 0
    %385 = vmatprep.subr.bf16.mxu0 0
    %386 = vmatpush1.bf16.msra.mxu0 0
    %387 = vmatprep.subr.bf16.mxu0 0
    %388 = vmatpush1.bf16.msra.mxu0 0
    %389 = vmatprep.subr.bf16.mxu0 0
    %390 = vmatpush1.bf16.msra.mxu0 0
    %391 = vmatprep.subr.bf16.mxu0 0
    %392 = vmatpush1.bf16.msra.mxu0 0
    %393 = vmatprep.subr.bf16.mxu0 0
    %394 = vmatpush1.bf16.msra.mxu0 0
    %395 = vmatprep.subr.bf16.mxu0 0
    %396 = vmatpush1.bf16.msra.mxu0 0
    %397 = vmatprep.subr.bf16.mxu0 0
    %398 = vmatpush1.bf16.msra.mxu0 0
    %399 = vmatprep.subr.bf16.mxu0 0
    %400 = vmatpush1.bf16.msra.mxu0 0
    %401 = vmatprep.subr.bf16.mxu0 0
    %402 = vmatpush1.bf16.msra.mxu0 0
    %403 = vmatprep.subr.bf16.mxu0 0
    %404 = vmatpush1.bf16.msra.mxu0 0
    %405 = vmatprep.subr.bf16.mxu0 0
    %406 = vmatpush1.bf16.msra.mxu0 0
    %407 = vmatprep.mubr.bf16.mxu0 0
    %408 = vmatmul.mubr.bf16.gmra.mrb[0].mxu0 %v370
    %v409 = vpop.f32.mrb[0].mxu0
    %v410 = vadd.f32 %v342, %v409
    %v411 = vpop.f32.mrb[0].mxu0
    %v412 = vpop.f32.mrb[0].mxu0
    %v413 = vadd.f32 %v347, %v412
    %v414 = vpop.f32.mrb[0].mxu0
    %415 = vmatprep.mubr.bf16.mxu0 0
    %416 = vmatmul.mubr.bf16.gmra.mrb[0].mxu0 %v373
    %v417 = vpop.f32.mrb[0].mxu0
    %v418 = vadd.f32 %v352, %v417
    %v419 = vpop.f32.mrb[0].mxu0
    %v420 = vpop.f32.mrb[0].mxu0
    %v421 = vadd.f32 %v357, %v420
    %v422 = vpop.f32.mrb[0].mxu0
    %423 = vdwg.mxu0
    %v424 = vmax.f32 %v410, 0.0
    %v425 = vmax.f32 %v413, 0.0
    %v426 = vmax.f32 %v418, 0.0
    %v427 = vmax.f32 %v421, 0.0
    %v428 = vpack.c.bf16 %v425, %v424
    %v429 = vpack.c.bf16 %v427, %v426
    %s430 = scalar_lea.vmem %s2, 48
    %v431 = vld [vmem:[%s430] sm:$0xf]
    %v432 = vld [vmem:[%s430 + $0x4] sm:$0xf]
    %v433 = vld [vmem:[%s430 + $0x8] sm:$0xf]
    %v434 = vld [vmem:[%s430 + $0xc] sm:$0xf]
    %s435 = scalar_lea.vmem %s4, 128
    %v436 = vld [vmem:[%s435] sm:$0xff]
    %v437 = vld [vmem:[%s435 + $0x8] sm:$0xff]
    %v438 = vld [vmem:[%s435 + $0x10] sm:$0xff]
    %v439 = vld [vmem:[%s435 + $0x18] sm:$0xff]
    %441 = vset.pattern.permute.xlu0 0
    %442 = vperm.xlu0 %441, %v436
    %v443 = vpop.permute.xlu0 %442
    %446 = vset.pattern.permute.xlu0 0
    %447 = vperm.xlu0 %446, %v437
    %v448 = vpop.permute.xlu0 %447
    %451 = vset.pattern.permute.xlu0 0
    %452 = vperm.xlu0 %451, %v438
    %v453 = vpop.permute.xlu0 %452
    %456 = vset.pattern.permute.xlu0 0
    %457 = vperm.xlu0 %456, %v439
    %v458 = vpop.permute.xlu0 %457
    %v464 = vunpack.c.l.b16 %v431
    %v465 = vunpack.c.l.b16 %v432
    %v466 = vunpack.c.l.b16 %v433
    %v467 = vunpack.c.l.b16 %v434
    %v468 = vpack.c.b16 %v465, %v464
    %v469 = vpack.c.b16 %v467, %v466
    %v471 = vsel %vm166, %v468, 0
    %v474 = vsel %vm166, %v469, 0
    %476 = vmatprep.subr.bf16.mxu0 0
    %477 = vmatpush1.bf16.msra.mxu0 %v428
    %478 = vmatprep.subr.bf16.mxu0 0
    %479 = vmatpush1.bf16.msra.mxu0 %v429
    %480 = vmatprep.subr.bf16.mxu0 0
    %481 = vmatpush1.bf16.msra.mxu0 0
    %482 = vmatprep.subr.bf16.mxu0 0
    %483 = vmatpush1.bf16.msra.mxu0 0
    %484 = vmatprep.subr.bf16.mxu0 0
    %485 = vmatpush1.bf16.msra.mxu0 0
    %486 = vmatprep.subr.bf16.mxu0 0
    %487 = vmatpush1.bf16.msra.mxu0 0
    %488 = vmatprep.subr.bf16.mxu0 0
    %489 = vmatpush1.bf16.msra.mxu0 0
    %490 = vmatprep.subr.bf16.mxu0 0
    %491 = vmatpush1.bf16.msra.mxu0 0
    %492 = vmatprep.subr.bf16.mxu0 0
    %493 = vmatpush1.bf16.msra.mxu0 0
    %494 = vmatprep.subr.bf16.mxu0 0
    %495 = vmatpush1.bf16.msra.mxu0 0
    %496 = vmatprep.subr.bf16.mxu0 0
    %497 = vmatpush1.bf16.msra.mxu0 0
    %498 = vmatprep.subr.bf16.mxu0 0
    %499 = vmatpush1.bf16.msra.mxu0 0
    %500 = vmatprep.subr.bf16.mxu0 0
    %501 = vmatpush1.bf16.msra.mxu0 0
    %502 = vmatprep.subr.bf16.mxu0 0
    %503 = vmatpush1.bf16.msra.mxu0 0
    %504 = vmatprep.subr.bf16.mxu0 0
    %505 = vmatpush1.bf16.msra.mxu0 0
    %506 = vmatprep.subr.bf16.mxu0 0
    %507 = vmatpush1.bf16.msra.mxu0 0
    %508 = vmatprep.mubr.bf16.mxu0 0
    %509 = vmatmul.mubr.bf16.gmra.mrb[0].mxu0 %v471
    %v510 = vpop.f32.mrb[0].mxu0
    %v511 = vadd.f32 %v443, %v510
    %v512 = vpop.f32.mrb[0].mxu0
    %v513 = vpop.f32.mrb[0].mxu0
    %v514 = vadd.f32 %v448, %v513
    %v515 = vpop.f32.mrb[0].mxu0
    %516 = vmatprep.mubr.bf16.mxu0 0
    %517 = vmatmul.mubr.bf16.gmra.mrb[0].mxu0 %v474
    %v518 = vpop.f32.mrb[0].mxu0
    %v519 = vadd.f32 %v453, %v518
    %v520 = vpop.f32.mrb[0].mxu0
    %v521 = vpop.f32.mrb[0].mxu0
    %v522 = vadd.f32 %v458, %v521
    %v523 = vpop.f32.mrb[0].mxu0
    %524 = vdwg.mxu0
    %v525 = vmax.f32 %v511, 0.0
    %v526 = vmax.f32 %v514, 0.0
    %v527 = vmax.f32 %v519, 0.0
    %v528 = vmax.f32 %v522, 0.0
    %v529 = vpack.c.bf16 %v526, %v525
    %v530 = vpack.c.bf16 %v528, %v527
    %v531 = vld [vmem:[%s3] sm:$0xf]
    %s532 = scalar_lea.vmem %s4, 160
    %v533 = vld [vmem:[%s532] sm:$0xff]
    %535 = vset.pattern.permute.xlu0 0
    %536 = vperm.xlu0 %535, %v533
    %v537 = vpop.permute.xlu0 %536
    %v540 = vsel %vm166, %v531, 0
    %542 = vmatprep.subr.bf16.mxu0 0
    %543 = vmatpush1.bf16.msra.mxu0 %v529
    %544 = vmatprep.subr.bf16.mxu0 0
    %545 = vmatpush1.bf16.msra.mxu0 %v530
    %546 = vmatprep.subr.bf16.mxu0 0
    %547 = vmatpush1.bf16.msra.mxu0 0
    %548 = vmatprep.subr.bf16.mxu0 0
    %549 = vmatpush1.bf16.msra.mxu0 0
    %550 = vmatprep.subr.bf16.mxu0 0
    %551 = vmatpush1.bf16.msra.mxu0 0
    %552 = vmatprep.subr.bf16.mxu0 0
    %553 = vmatpush1.bf16.msra.mxu0 0
    %554 = vmatprep.subr.bf16.mxu0 0
    %555 = vmatpush1.bf16.msra.mxu0 0
    %556 = vmatprep.subr.bf16.mxu0 0
    %557 = vmatpush1.bf16.msra.mxu0 0
    %558 = vmatprep.subr.bf16.mxu0 0
    %559 = vmatpush1.bf16.msra.mxu0 0
    %560 = vmatprep.subr.bf16.mxu0 0
    %561 = vmatpush1.bf16.msra.mxu0 0
    %562 = vmatprep.subr.bf16.mxu0 0
    %563 = vmatpush1.bf16.msra.mxu0 0
    %564 = vmatprep.subr.bf16.mxu0 0
    %565 = vmatpush1.bf16.msra.mxu0 0
    %566 = vmatprep.subr.bf16.mxu0 0
    %567 = vmatpush1.bf16.msra.mxu0 0
    %568 = vmatprep.subr.bf16.mxu0 0
    %569 = vmatpush1.bf16.msra.mxu0 0
    %570 = vmatprep.subr.bf16.mxu0 0
    %571 = vmatpush1.bf16.msra.mxu0 0
    %572 = vmatprep.subr.bf16.mxu0 0
    %573 = vmatpush1.bf16.msra.mxu0 0
    %574 = vmatprep.mubr.bf16.mxu0 0
    %575 = vmatmul.mubr.bf16.gmra.mrb[0].mxu0 %v540
    %v576 = vpop.f32.mrb[0].mxu0
    %v577 = vadd.f32 %v537, %v576
    %v578 = vpop.f32.mrb[0].mxu0
    %v579 = vpop.f32.mrb[0].mxu0
    %v580 = vpop.f32.mrb[0].mxu0
    %581 = vdwg.mxu0
    %v582 = vmax.f32 %v577, 0.0
    %vm583 = vcmask 57344
    %584 = vst.msk [vmem:[#allocation2] sm:$0x1] %vm583, %v582
    // Predicated region
    $region22: #{net5_forward.1} parent=1 // pred_check
      _
    $region23: #{net5_forward.1} parent=1 // pred_check_branch
      %586 = sbr.rel (0) target = $region25
    $region24: #{net5_forward.1} parent=1 // pred_region
      %s588 = ssub.s32 16, 16
      %589 = vsyncadd [#allocation3], %s588
      %s591 = sshll.u32 [#allocation2], 4
      %s592 = int_to_ptr.vmem [resolvable:$true] %s591
      %594 = dma.vmem_to_hbm [thread:$0]  %s592, 16, %s5, [#allocation3]
    $region25: #{net5_forward.1} parent=1 // pred_fallthru
      _
    // Predicated region
    $region26: #{net5_forward.1} parent=1 // pred_check
      _
    $region27: #{net5_forward.1} parent=1 // pred_check_branch
      %596 = sbr.rel (0) target = $region29
    $region28: #{net5_forward.1} parent=1 // pred_region
      %597 = dma.done [#allocation3], 16
    $region29: #{net5_forward.1} parent=1 // pred_fallthru
      _
    %598 = vsyncpa [#allocation3], 1

</llo_original>
